<compile_context>
chip_gen: v5e
topology: v5e:2x2
jax: 0.10.0
libtpu: 0.0.40
codegen_flags: <defaults>
</compile_context>

<pallas_src>
import functools

import jax
import jax.numpy as jnp
import numpy as np
from jax.experimental import pallas as pl
from jax.experimental.pallas import tpu as pltpu


# --------------------------------------------------------------------------
# Kernel
# --------------------------------------------------------------------------
def _fuse_block_kernel(x_ref, w1_ref, b1_ref, wf_ref, bf_ref, o_ref, *,
                       n_tokens):
    # x_ref: (BB*N, Di)  — 2-D, sublane-dense (no bf16 padding of the N axis).
    # One MXU pass for the whole block, f32 accumulation.
    h = jnp.dot(x_ref[...], w1_ref[...], preferred_element_type=jnp.float32)
    h = jnp.maximum(h + b1_ref[...], 0.0)                    # (BB*N, H), f32

    # Token sum (the 1/N mean scale is folded into Wf host-side).
    # N == 8 here, so the (BB*N, H) -> (BB, N, H) split is sublane-tile
    # aligned in f32 and the reduce stays cheap.
    rows, hdim = h.shape
    s = jnp.sum(h.reshape(rows // n_tokens, n_tokens, hdim), axis=1)  # (BB, H)

    # Fused second+third linear: Wf = W2 @ W3 / N, bf = b2 @ W3 + b3.
    y = jnp.dot(s.astype(wf_ref.dtype), wf_ref[...],
                preferred_element_type=jnp.float32)
    o_ref[...] = (y + bf_ref[...]).astype(o_ref.dtype)        # (BB, Do)


# --------------------------------------------------------------------------
# One-time parameter preparation (weight fold), hoisted out of the call path.
# --------------------------------------------------------------------------
def prepare_fuse_block_params(w1, b1, w2, b2, w3, b3, *, n_tokens,
                              compute_dtype=jnp.bfloat16):
    """Fold W2@W3, b2@W3+b3 and the 1/N mean scale once at init."""
    w3f = w3.astype(jnp.float32)
    wf = jnp.dot(w2.astype(jnp.float32), w3f) / float(n_tokens)      # (H, Do)
    bf = jnp.dot(b2.astype(jnp.float32), w3f) + b3.astype(jnp.float32)  # (1, Do)
    return {
        "w1": w1.astype(compute_dtype),       # (Di, H)
        "b1": b1.astype(jnp.float32),         # (1, H)   biases stay f32
        "wf": wf.astype(compute_dtype),       # (H, Do)
        "bf": bf.astype(jnp.float32),         # (1, Do)
        "n_tokens": int(n_tokens),
    }


# --------------------------------------------------------------------------
# Batch-block selection: VMEM-capped, multiple of 8, keeps >= ~4 grid steps.
# --------------------------------------------------------------------------
def _choose_block_b(batch, n_tokens, compute_itemsize, block_b,
                    vmem_budget_bytes=12 * 1024 * 1024):
    # Per-step footprint estimate (last dim pads to 128 lanes):
    #   x tile  : BB*N rows * 128 * itemsize, double-buffered
    #   h       : BB*N rows * 128 * 4 B (f32 accumulation)
    #   out tile: BB   rows * 128 * 4 B, double-buffered
    per_bb = n_tokens * 128 * (2 * compute_itemsize + 4) + 2 * 128 * 4
    bb_vmem = max(8, vmem_budget_bytes // per_bb)
    # Keep >= ~4 grid steps when the batch allows it (v7x megacore + pipeline).
    bb_steps = ((-(-batch // 4) + 7) // 8) * 8
    bb = min(int(block_b), int(bb_vmem), int(bb_steps))
    return max(8, (bb // 8) * 8)


# --------------------------------------------------------------------------
# Wrapper
# --------------------------------------------------------------------------
def fuse_block(x, params, *, block_b=1024):
    """x: (B, N, Di) f32; params from prepare_fuse_block_params. Returns (B, Do)."""
    B, N, Di = x.shape
    w1, b1 = params["w1"], params["b1"]
    wf, bf = params["wf"], params["bf"]
    assert params["n_tokens"] == N
    H = w1.shape[1]
    Do = wf.shape[1]
    out_dtype = x.dtype
    cdt = w1.dtype

    # 2-D, lane/sublane-dense x layout: (B*N, Di).  The (B,N,Di)->(B*N,Di)
    # reshape is contiguous, so it is free in the wrapper.
    x_c = x.astype(cdt).reshape(B * N, Di)

    BB = _choose_block_b(B, N, jnp.dtype(cdt).itemsize, block_b)
    Bp = pl.cdiv(B, BB) * BB
    if Bp != B:
        x_c = jnp.pad(x_c, ((0, (Bp - B) * N), (0, 0)))
    grid = (Bp // BB,)

    kernel = functools.partial(_fuse_block_kernel, n_tokens=N)

    out = pl.pallas_call(
        kernel,
        out_shape=jax.ShapeDtypeStruct((Bp, Do), out_dtype),
        grid_spec=pltpu.PrefetchScalarGridSpec(
            num_scalar_prefetch=0,
            grid=grid,
            in_specs=[
                pl.BlockSpec((BB * N, Di), lambda b: (b, 0)),  # x: streams
                pl.BlockSpec((Di, H), lambda b: (0, 0)),       # W1 (resident, ~KiB)
                pl.BlockSpec((1, H), lambda b: (0, 0)),        # b1 (f32)
                pl.BlockSpec((H, Do), lambda b: (0, 0)),       # Wf = W2@W3/N
                pl.BlockSpec((1, Do), lambda b: (0, 0)),       # bf = b2@W3 + b3
            ],
            out_specs=pl.BlockSpec((BB, Do), lambda b: (b, 0)),  # sublane-dense
        ),
        compiler_params=pltpu.CompilerParams(
            dimension_semantics=("parallel",),
        ),
    )(x_c, w1, b1, wf, bf)

    return out[:B] if Bp != B else out


# --------------------------------------------------------------------------
# Pure-JAX reference (mirrors the PyTorch module exactly, f32).
# --------------------------------------------------------------------------
def fuse_block_ref(x, w1, b1, w2, b2, w3, b3):
    h = jnp.maximum(jnp.einsum("bnd,dh->bnh", x, w1) + b1, 0.0)
    h2 = jnp.einsum("bnh,hk->bnk", h, w2) + b2
    m = jnp.mean(h2, axis=1)
    return jnp.einsum("bh,ho->bo", m, w3) + b3


if __name__ == "__main__":
    # Small, module-consistent shapes; B chosen so the batch-block logic
    # produces a multi-step grid (BB=16 -> 4 steps).
    B, N = 64, 8
    dim_i, dim_hid, dim_out = 32, 32, 16

    key = jax.random.PRNGKey(0)
    kx, k1, kb1, k2, kb2, k3, kb3 = jax.random.split(key, 7)

    x = jax.random.normal(kx, (B, N, dim_i), dtype=jnp.float32)

    def uinit(k, shape, fan_in):
        bound = 1.0 / np.sqrt(fan_in)
        return jax.random.uniform(k, shape, jnp.float32, -bound, bound)

    w1 = uinit(k1, (dim_i, dim_hid), dim_i)
    b1 = uinit(kb1, (1, dim_hid), dim_i)
    w2 = uinit(k2, (dim_hid, dim_hid), dim_hid)
    b2 = uinit(kb2, (1, dim_hid), dim_hid)
    w3 = uinit(k3, (dim_hid, dim_out), dim_hid)
    b3 = uinit(kb3, (1, dim_out), dim_hid)

    ref = fuse_block_ref(x, w1, b1, w2, b2, w3, b3)

    # Default path: bf16 compute (f32 accumulation) — wider tolerance covers
    # bf16 quantization of x/W1 and of the folded Wf product.
    params_bf16 = prepare_fuse_block_params(
        w1, b1, w2, b2, w3, b3, n_tokens=N, compute_dtype=jnp.bfloat16)
    out_bf16 = jax.block_until_ready(fuse_block(x, params_bf16))
    np.testing.assert_allclose(np.asarray(out_bf16), np.asarray(ref),
                               rtol=5e-2, atol=5e-2)

    # f32 compute path: only FP reassociation from the (exact-algebra) fold.
    params_f32 = prepare_fuse_block_params(
        w1, b1, w2, b2, w3, b3, n_tokens=N, compute_dtype=jnp.float32)
    out_f32 = jax.block_until_ready(fuse_block(x, params_f32))
    np.testing.assert_allclose(np.asarray(out_f32), np.asarray(ref),
                               rtol=1e-4, atol=1e-4)

    print("KERNEL_OK")
</pallas_src>

<mosaic_0001>
module attributes {stable_mosaic.version = 11 : i64} {
  func.func @_fuse_block_kernel(%arg0: i32, %arg1: memref<128x32xbf16, #tpu.memory_space<vmem>>, %arg2: memref<32x32xbf16, #tpu.memory_space<vmem>>, %arg3: memref<1x32xf32, #tpu.memory_space<vmem>>, %arg4: memref<32x16xbf16, #tpu.memory_space<vmem>>, %arg5: memref<1x16xf32, #tpu.memory_space<vmem>>, %arg6: memref<16x16xf32, #tpu.memory_space<vmem>>) attributes {dimension_semantics = [#tpu.dimension_semantics<parallel>], iteration_bounds = array<i64: 4>, scalar_prefetch = 0 : i64, scratch_operands = 0 : i64, tpu.core_type = #tpu.core_type<tc>, window_params = [{transform_indices = @transform_0, window_bounds = array<i64: 128, 32>}, {pipeline_mode = #tpu.pipeline_mode<synchronous>, transform_indices = @transform_1, window_bounds = array<i64: 32, 32>}, {pipeline_mode = #tpu.pipeline_mode<synchronous>, transform_indices = @transform_2, window_bounds = array<i64: 1, 32>}, {pipeline_mode = #tpu.pipeline_mode<synchronous>, transform_indices = @transform_3, window_bounds = array<i64: 32, 16>}, {pipeline_mode = #tpu.pipeline_mode<synchronous>, transform_indices = @transform_4, window_bounds = array<i64: 1, 16>}, {transform_indices = @transform_5, window_bounds = array<i64: 16, 16>}]} {
    %c0 = arith.constant 0 : index
    %c0_0 = arith.constant 0 : index
    %0 = vector.load %arg1[%c0, %c0_0] : memref<128x32xbf16, #tpu.memory_space<vmem>>, vector<128x32xbf16>
    %c0_1 = arith.constant 0 : index
    %c0_2 = arith.constant 0 : index
    %1 = vector.load %arg2[%c0_1, %c0_2] : memref<32x32xbf16, #tpu.memory_space<vmem>>, vector<32x32xbf16>
    %cst = arith.constant dense<0.000000e+00> : vector<128x32xf32>
    %2 = tpu.matmul %0, %1, %cst {dimension_numbers = #tpu.dot_dimension_numbers<[1], [0], [0], [1], [0, 0, 1, 1], [], []>} : vector<128x32xbf16>, vector<32x32xbf16>, vector<128x32xf32> -> vector<128x32xf32>
    %c0_3 = arith.constant 0 : index
    %c0_4 = arith.constant 0 : index
    %3 = vector.load %arg3[%c0_3, %c0_4] : memref<1x32xf32, #tpu.memory_space<vmem>>, vector<1x32xf32>
    %4 = vector.broadcast %3 : vector<1x32xf32> to vector<128x32xf32>
    %5 = arith.addf %2, %4 : vector<128x32xf32>
    %cst_5 = arith.constant 0.000000e+00 : f32
    %6 = vector.broadcast %cst_5 : f32 to vector<128x32xf32>
    %7 = arith.maximumf %5, %6 : vector<128x32xf32>
    %8 = vector.shape_cast %7 : vector<128x32xf32> to vector<16x8x32xf32>
    %cst_6 = arith.constant dense<0.000000e+00> : vector<16x32xf32>
    %9 = vector.multi_reduction <add>, %8, %cst_6 [1] : vector<16x8x32xf32> to vector<16x32xf32>
    %10 = arith.truncf %9 : vector<16x32xf32> to vector<16x32xbf16>
    %c0_7 = arith.constant 0 : index
    %c0_8 = arith.constant 0 : index
    %11 = vector.load %arg4[%c0_7, %c0_8] : memref<32x16xbf16, #tpu.memory_space<vmem>>, vector<32x16xbf16>
    %cst_9 = arith.constant dense<0.000000e+00> : vector<16x16xf32>
    %12 = tpu.matmul %10, %11, %cst_9 {dimension_numbers = #tpu.dot_dimension_numbers<[1], [0], [0], [1], [0, 0, 1, 1], [], []>} : vector<16x32xbf16>, vector<32x16xbf16>, vector<16x16xf32> -> vector<16x16xf32>
    %c0_10 = arith.constant 0 : index
    %c0_11 = arith.constant 0 : index
    %13 = vector.load %arg5[%c0_10, %c0_11] : memref<1x16xf32, #tpu.memory_space<vmem>>, vector<1x16xf32>
    %14 = vector.broadcast %13 : vector<1x16xf32> to vector<16x16xf32>
    %15 = arith.addf %12, %14 : vector<16x16xf32>
    %c0_12 = arith.constant 0 : index
    %c0_13 = arith.constant 0 : index
    %16 = vector.load %arg6[%c0_12, %c0_13] : memref<16x16xf32, #tpu.memory_space<vmem>>, vector<16x16xf32>
    tpu.vector_store %arg6[%c0_12, %c0_13], %15 {strides = array<i32>} : memref<16x16xf32, #tpu.memory_space<vmem>>, vector<16x16xf32>,
    return
  }
  func.func @transform_0(%arg0: i32) -> (i32, i32) {
    %c0_i32 = arith.constant 0 : i32
    %c0_i32_0 = arith.constant 0 : i32
    return %arg0, %c0_i32 : i32, i32
  }
  func.func @transform_1(%arg0: i32) -> (i32, i32) {
    %c0_i32 = arith.constant 0 : i32
    %c0_i32_0 = arith.constant 0 : i32
    %c0_i32_1 = arith.constant 0 : i32
    return %c0_i32, %c0_i32_0 : i32, i32
  }
  func.func @transform_2(%arg0: i32) -> (i32, i32) {
    %c0_i32 = arith.constant 0 : i32
    %c0_i32_0 = arith.constant 0 : i32
    %c0_i32_1 = arith.constant 0 : i32
    return %c0_i32, %c0_i32_0 : i32, i32
  }
  func.func @transform_3(%arg0: i32) -> (i32, i32) {
    %c0_i32 = arith.constant 0 : i32
    %c0_i32_0 = arith.constant 0 : i32
    %c0_i32_1 = arith.constant 0 : i32
    return %c0_i32, %c0_i32_0 : i32, i32
  }
  func.func @transform_4(%arg0: i32) -> (i32, i32) {
    %c0_i32 = arith.constant 0 : i32
    %c0_i32_0 = arith.constant 0 : i32
    %c0_i32_1 = arith.constant 0 : i32
    return %c0_i32, %c0_i32_0 : i32, i32
  }
  func.func @transform_5(%arg0: i32) -> (i32, i32) {
    %c0_i32 = arith.constant 0 : i32
    %c0_i32_0 = arith.constant 0 : i32
    return %arg0, %c0_i32 : i32, i32
  }
}

</mosaic_0001>

<llo_original>
// kernel: tpu_custom_call.1
$region0: #{tpu_custom_call.1}
  #allocation0 [shape = 'u32[]', space=smem, size = 0x4, offset = 0x4, fixed_abs, tag = 'smem constant byte address 0x4 - core index']
  #allocation1 [shape = 'u32[72,128]{1,0:T(1,128)}', space=vmem, size = 0x9000, scoped, tag = 'internal scratch']
  %s0 = inlined_call_operand.vmem [shape: bf16[512,32], index: 0, kind: input, shape index: {}]
  %s1 = inlined_call_operand.vmem [shape: bf16[32,32], index: 1, kind: input, shape index: {}]
  %s2 = inlined_call_operand.vmem [shape: f32[1,32], index: 2, kind: input, shape index: {}]
  %s3 = inlined_call_operand.vmem [shape: bf16[32,16], index: 3, kind: input, shape index: {}]
  %s4 = inlined_call_operand.vmem [shape: f32[1,16], index: 4, kind: input, shape index: {}]
  %s5 = inlined_call_operand.vmem [shape: f32[64,16], index: 5, kind: output, shape index: {}]
  %s6 = sld [smem:[#allocation0]]
  $region53: #{tpu_custom_call.1} parent=0
    _
  %s8 = ssub.s32 1, %s6
  %s9 = scalar_select 0, %s8, %s6
  loop: start=0, step=1, limit=6
  $region2: #{tpu_custom_call.1} parent=0 // loop_pre_header
    _
  $region3: #{tpu_custom_call.1} parent=0 // loop_header
    %s11 = sphi 0, %s15
    %p12 = scmp.ge.s32.totalorder %s11, 6
    %s21 = sphi 0, %s23
    %s24 = sphi 0, %s21
    %s25 = sphi 0, %s24
    %s41 = sphi 0, %s25
    %s45 = sphi 0, %s45
    %s47 = sphi 0, %s45
    %s48 = sphi 0, %s47
    %s62 = sphi 0, %s48
    %s66 = sphi 0, %s66
    %s68 = sphi 0, %s66
    %s69 = sphi 0, %s68
    %s83 = sphi 0, %s69
    %s87 = sphi 0, %s87
    %s89 = sphi 0, %s87
    %s90 = sphi 0, %s89
    %s104 = sphi 0, %s90
    %s108 = sphi 0, %s108
    %s110 = sphi 0, %s108
    %s111 = sphi 0, %s110
    %s125 = sphi 0, %s111
    %s131 = sphi 0, %s133
    %s134 = sphi 0, %s131
    %s135 = sphi 0, %s134
    %s151 = sphi 0, %s135
  $region4: #{tpu_custom_call.1} parent=0 // loop_header_branch
    %14 = sbr.rel (%p12) target = $region8
  $region5: #{tpu_custom_call.1} parent=0 // loop_body
    %s16 = ssub.s32 %s11, 1
    %s17 = ssub.s32 %s11, 2
    %s18 = sadd.s32 %s11, 1
    %s19 = ssub.s32 %s11, %s18
    %p20 = scmp.eq.s32.totalorder %s19, 0
    %s22 = sadd.s32 %s21, 1
    %s23 = scalar_select %p20, %s21, %s22
    %p26 = pneg %p20
    %p27 = scmp.eq.s32.totalorder %s11, 3
    %p28 = por %p26, %p27
    %p29 = scmp.ne.s32.totalorder %s21, %s24
    %p30 = scmp.eq.s32.totalorder %s11, 0
    %p31 = por %p29, %p30
    %p32 = scmp.ne.s32.totalorder %s21, %s24
    %p33 = scmp.eq.s32.totalorder %s16, 3
    %p34 = por %p32, %p33
    %p35 = scmp.ne.s32.totalorder %s24, %s25
    %p36 = scmp.eq.s32.totalorder %s16, 0
    %p37 = por %p35, %p36
    %p38 = scmp.ne.s32.totalorder %s24, %s25
    %p39 = scmp.eq.s32.totalorder %s17, 3
    %p40 = por %p38, %p39
    %p42 = scmp.ne.s32.totalorder %s25, %s41
    %p43 = scmp.eq.s32.totalorder %s17, 0
    %p44 = por %p42, %p43
    %s46 = sadd.s32 %s45, 1
    %p49 = scmp.eq.s32.totalorder %s11, 3
    %p50 = scmp.ne.s32.totalorder %s45, %s47
    %p51 = scmp.eq.s32.totalorder %s11, 0
    %p52 = por %p50, %p51
    %p53 = scmp.ne.s32.totalorder %s45, %s47
    %p54 = scmp.eq.s32.totalorder %s16, 3
    %p55 = por %p53, %p54
    %p56 = scmp.ne.s32.totalorder %s47, %s48
    %p57 = scmp.eq.s32.totalorder %s16, 0
    %p58 = por %p56, %p57
    %p59 = scmp.ne.s32.totalorder %s47, %s48
    %p60 = scmp.eq.s32.totalorder %s17, 3
    %p61 = por %p59, %p60
    %p63 = scmp.ne.s32.totalorder %s48, %s62
    %p64 = scmp.eq.s32.totalorder %s17, 0
    %p65 = por %p63, %p64
    %s67 = sadd.s32 %s66, 1
    %p70 = scmp.eq.s32.totalorder %s11, 3
    %p71 = scmp.ne.s32.totalorder %s66, %s68
    %p72 = scmp.eq.s32.totalorder %s11, 0
    %p73 = por %p71, %p72
    %p74 = scmp.ne.s32.totalorder %s66, %s68
    %p75 = scmp.eq.s32.totalorder %s16, 3
    %p76 = por %p74, %p75
    %p77 = scmp.ne.s32.totalorder %s68, %s69
    %p78 = scmp.eq.s32.totalorder %s16, 0
    %p79 = por %p77, %p78
    %p80 = scmp.ne.s32.totalorder %s68, %s69
    %p81 = scmp.eq.s32.totalorder %s17, 3
    %p82 = por %p80, %p81
    %p84 = scmp.ne.s32.totalorder %s69, %s83
    %p85 = scmp.eq.s32.totalorder %s17, 0
    %p86 = por %p84, %p85
    %s88 = sadd.s32 %s87, 1
    %p91 = scmp.eq.s32.totalorder %s11, 3
    %p92 = scmp.ne.s32.totalorder %s87, %s89
    %p93 = scmp.eq.s32.totalorder %s11, 0
    %p94 = por %p92, %p93
    %p95 = scmp.ne.s32.totalorder %s87, %s89
    %p96 = scmp.eq.s32.totalorder %s16, 3
    %p97 = por %p95, %p96
    %p98 = scmp.ne.s32.totalorder %s89, %s90
    %p99 = scmp.eq.s32.totalorder %s16, 0
    %p100 = por %p98, %p99
    %p101 = scmp.ne.s32.totalorder %s89, %s90
    %p102 = scmp.eq.s32.totalorder %s17, 3
    %p103 = por %p101, %p102
    %p105 = scmp.ne.s32.totalorder %s90, %s104
    %p106 = scmp.eq.s32.totalorder %s17, 0
    %p107 = por %p105, %p106
    %s109 = sadd.s32 %s108, 1
    %p112 = scmp.eq.s32.totalorder %s11, 3
    %p113 = scmp.ne.s32.totalorder %s108, %s110
    %p114 = scmp.eq.s32.totalorder %s11, 0
    %p115 = por %p113, %p114
    %p116 = scmp.ne.s32.totalorder %s108, %s110
    %p117 = scmp.eq.s32.totalorder %s16, 3
    %p118 = por %p116, %p117
    %p119 = scmp.ne.s32.totalorder %s110, %s111
    %p120 = scmp.eq.s32.totalorder %s16, 0
    %p121 = por %p119, %p120
    %p122 = scmp.ne.s32.totalorder %s110, %s111
    %p123 = scmp.eq.s32.totalorder %s17, 3
    %p124 = por %p122, %p123
    %p126 = scmp.ne.s32.totalorder %s111, %s125
    %p127 = scmp.eq.s32.totalorder %s17, 0
    %p128 = por %p126, %p127
    %s129 = ssub.s32 %s11, %s18
    %p130 = scmp.eq.s32.totalorder %s129, 0
    %s132 = sadd.s32 %s131, 1
    %s133 = scalar_select %p130, %s131, %s132
    %p136 = pneg %p130
    %p137 = scmp.eq.s32.totalorder %s11, 3
    %p138 = por %p136, %p137
    %p139 = scmp.ne.s32.totalorder %s131, %s134
    %p140 = scmp.eq.s32.totalorder %s11, 0
    %p141 = por %p139, %p140
    %p142 = scmp.ne.s32.totalorder %s131, %s134
    %p143 = scmp.eq.s32.totalorder %s16, 3
    %p144 = por %p142, %p143
    %p145 = scmp.ne.s32.totalorder %s134, %s135
    %p146 = scmp.eq.s32.totalorder %s16, 0
    %p147 = por %p145, %p146
    %p148 = scmp.ne.s32.totalorder %s134, %s135
    %p149 = scmp.eq.s32.totalorder %s17, 3
    %p150 = por %p148, %p149
    %p152 = scmp.ne.s32.totalorder %s135, %s151
    %p153 = scmp.eq.s32.totalorder %s17, 0
    %p154 = por %p152, %p153
    %p155 = scmp.le.s32.totalorder 1, %s11
    %p156 = scmp.lt.s32.totalorder %s11, 5
    %p157 = pnand %p155, %p156
    %p158 = pneg %p157
    // Predicated region
    $region9: #{tpu_custom_call.1} parent=5 // pred_check
      _
    $region10: #{tpu_custom_call.1} parent=5 // pred_check_branch
      %160 = sbr.rel (%p157) target = $region12
    $region11: #{tpu_custom_call.1} parent=5 // pred_region
      %s161 = ssub.s32 %s11, 1
      // Predicated region
      $region13: #{tpu_custom_call.1} parent=11 // pred_check
        %p162 = pneg %p58
      $region14: #{tpu_custom_call.1} parent=11 // pred_check_branch
        %164 = sbr.rel (%p162) target = $region16
      $region15: #{tpu_custom_call.1} parent=11 // pred_region
        _
      $region16: #{tpu_custom_call.1} parent=11 // pred_fallthru
        _
      // Predicated region
      $region17: #{tpu_custom_call.1} parent=11 // pred_check
        %p165 = pneg %p79
      $region18: #{tpu_custom_call.1} parent=11 // pred_check_branch
        %167 = sbr.rel (%p165) target = $region20
      $region19: #{tpu_custom_call.1} parent=11 // pred_region
        _
      $region20: #{tpu_custom_call.1} parent=11 // pred_fallthru
        _
      // Predicated region
      $region21: #{tpu_custom_call.1} parent=11 // pred_check
        %p168 = pneg %p100
      $region22: #{tpu_custom_call.1} parent=11 // pred_check_branch
        %170 = sbr.rel (%p168) target = $region24
      $region23: #{tpu_custom_call.1} parent=11 // pred_region
        _
      $region24: #{tpu_custom_call.1} parent=11 // pred_fallthru
        _
      // Predicated region
      $region25: #{tpu_custom_call.1} parent=11 // pred_check
        %p171 = pneg %p121
      $region26: #{tpu_custom_call.1} parent=11 // pred_check_branch
        %173 = sbr.rel (%p171) target = $region28
      $region27: #{tpu_custom_call.1} parent=11 // pred_region
        _
      $region28: #{tpu_custom_call.1} parent=11 // pred_fallthru
        _
    $region12: #{tpu_custom_call.1} parent=5 // pred_fallthru
      _
    %p174 = scmp.lt.s32.totalorder %s11, 4
    // Predicated region
    $region29: #{tpu_custom_call.1} parent=5 // pred_check
      %p175 = pneg %p174
    $region30: #{tpu_custom_call.1} parent=5 // pred_check_branch
      %177 = sbr.rel (%p175) target = $region32
    $region31: #{tpu_custom_call.1} parent=5 // pred_region
      // Predicated region
      $region33: #{tpu_custom_call.1} parent=31 // pred_check
        %p178 = pneg %p31
      $region34: #{tpu_custom_call.1} parent=31 // pred_check_branch
        %180 = sbr.rel (%p178) target = $region36
      $region35: #{tpu_custom_call.1} parent=31 // pred_region
        %s181 = smul.u32 16, %s11
        %p182 = scmp.lt.s32.totalorder %s181, 63
        %s183 = scalar_select %p182, %s181, 63
        %s184 = smul.addr %s183, 4
        %s185 = scalar_lea.vmem %s0, %s184
        %s186 = smul.u32 16, %s11
      $region36: #{tpu_custom_call.1} parent=31 // pred_fallthru
        _
    $region32: #{tpu_custom_call.1} parent=5 // pred_fallthru
      _
    %p187 = scmp.le.s32.totalorder 1, %s11
    %p188 = scmp.lt.s32.totalorder %s11, 5
    %p189 = pnand %p187, %p188
    %p190 = pneg %p189
    // Predicated region
    $region37: #{tpu_custom_call.1} parent=5 // pred_check
      _
    $region38: #{tpu_custom_call.1} parent=5 // pred_check_branch
      %192 = sbr.rel (%p189) target = $region40
    $region39: #{tpu_custom_call.1} parent=5 // pred_region
      %s193 = ssub.s32 %s11, 1
      %s194 = smul.u32 16, %s16
      %p195 = scmp.lt.s32.totalorder %s194, 63
      %s196 = scalar_select %p195, %s194, 63
      %s197 = smul.addr %s196, 4
      %s198 = scalar_lea.vmem %s0, %s197
      %p199 = pneg %p37
      %p200 = pneg %p34
      %p201 = pneg %p58
      %p202 = pneg %p55
      %p203 = pneg %p79
      %p204 = pneg %p76
      %p205 = pneg %p100
      %p206 = pneg %p97
      %p207 = pneg %p121
      %p208 = pneg %p118
      %p209 = pneg %p147
      %p210 = pneg %p144
      %s211 = smul.u32 2, %s16
      %p212 = scmp.lt.s32.totalorder %s211, 7
      %s213 = scalar_select %p212, %s211, 7
      %s214 = smul.addr %s213, 8
      %s215 = scalar_lea.vmem %s5, %s214
      %s216 = smul.u32 16, %s16
      %p217 = scmp.lt.s32.totalorder %s216, 63
      %s218 = scalar_select %p217, %s216, 63
      %s219 = smul.addr %s218, 4
      %s220 = scalar_lea.vmem %s0, %s219
      %s221 = smul.u32 16, %s16
      %s222 = smul.u32 2, %s16
      %p223 = scmp.lt.s32.totalorder %s222, 7
      %s224 = scalar_select %p223, %s222, 7
      %s225 = smul.addr %s224, 8
      %s226 = scalar_lea.vmem %s5, %s225
      %s227 = smul.u32 2, %s16
      %v229 = vld [vmem:[%s220] sm:$0xf]
      %v230 = vld [vmem:[%s220 + $0x4] sm:$0xf]
      %v231 = vld [vmem:[%s220 + $0x8] sm:$0xf]
      %v232 = vld [vmem:[%s220 + $0xc] sm:$0xf]
      %v233 = vld [vmem:[%s220 + $0x10] sm:$0xf]
      %v234 = vld [vmem:[%s220 + $0x14] sm:$0xf]
      %v235 = vld [vmem:[%s220 + $0x18] sm:$0xf]
      %v236 = vld [vmem:[%s220 + $0x1c] sm:$0xf]
      %v237 = vld [vmem:[%s220 + $0x20] sm:$0xf]
      %v238 = vld [vmem:[%s220 + $0x24] sm:$0xf]
      %v239 = vld [vmem:[%s220 + $0x28] sm:$0xf]
      %v240 = vld [vmem:[%s220 + $0x2c] sm:$0xf]
      %v241 = vld [vmem:[%s220 + $0x30] sm:$0xf]
      %v242 = vld [vmem:[%s220 + $0x34] sm:$0xf]
      %v243 = vld [vmem:[%s220 + $0x38] sm:$0xf]
      %v244 = vld [vmem:[%s220 + $0x3c] sm:$0xf]
      %v245 = vld [vmem:[%s1] sm:$0xf]
      %v246 = vld [vmem:[%s1 + $0x4] sm:$0xf]
      %v247 = vld [vmem:[%s1 + $0x8] sm:$0xf]
      %v248 = vld [vmem:[%s1 + $0xc] sm:$0xf]
      %v249 = vld [vmem:[%s2] sm:$0x1]
      %v251 = vperm.slane %v249, 0
      %v269 = vunpack.c.l.b16 %v229
      %v270 = vunpack.c.l.b16 %v230
      %v271 = vunpack.c.l.b16 %v231
      %v272 = vunpack.c.l.b16 %v232
      %v273 = vunpack.c.l.b16 %v233
      %v274 = vunpack.c.l.b16 %v234
      %v275 = vunpack.c.l.b16 %v235
      %v276 = vunpack.c.l.b16 %v236
      %v277 = vunpack.c.l.b16 %v237
      %v278 = vunpack.c.l.b16 %v238
      %v279 = vunpack.c.l.b16 %v239
      %v280 = vunpack.c.l.b16 %v240
      %v281 = vunpack.c.l.b16 %v241
      %v282 = vunpack.c.l.b16 %v242
      %v283 = vunpack.c.l.b16 %v243
      %v284 = vunpack.c.l.b16 %v244
      %v285 = vpack.c.b16 %v270, %v269
      %v286 = vpack.c.b16 %v272, %v271
      %v287 = vpack.c.b16 %v274, %v273
      %v288 = vpack.c.b16 %v276, %v275
      %v289 = vpack.c.b16 %v278, %v277
      %v290 = vpack.c.b16 %v280, %v279
      %v291 = vpack.c.b16 %v282, %v281
      %v292 = vpack.c.b16 %v284, %v283
      %v297 = vunpack.c.l.b16 %v245
      %v298 = vunpack.c.l.b16 %v246
      %v299 = vunpack.c.l.b16 %v247
      %v300 = vunpack.c.l.b16 %v248
      %v301 = vpack.c.b16 %v298, %v297
      %v302 = vpack.c.b16 %v300, %v299
      %vm305 = vcmask 261120
      %v307 = vsel %vm305, %v285, 0
      %v310 = vsel %vm305, %v286, 0
      %v313 = vsel %vm305, %v287, 0
      %v316 = vsel %vm305, %v288, 0
      %v319 = vsel %vm305, %v289, 0
      %v322 = vsel %vm305, %v290, 0
      %v325 = vsel %vm305, %v291, 0
      %v328 = vsel %vm305, %v292, 0
      %330 = vmatpush.bf16.msra.mxu0 0
      %331 = vmatpush.bf16.msra.mxu0 0
      %332 = vmatpush.bf16.msra.mxu0 0
      %333 = vmatpush.bf16.msra.mxu0 0
      %334 = vmatpush.bf16.msra.mxu0 0
      %335 = vmatpush.bf16.msra.mxu0 0
      %336 = vmatpush.bf16.msra.mxu0 %v302
      %337 = vmatpush.bf16.msra.mxu0 %v301
      %338 = vmatmul.bf16.gmra.mxu0 %v307
      %v339 = vpop.f32.mrf.mxu0
      %v340 = vadd.f32 %v251, %v339
      %v341 = vpop.f32.mrf.mxu0
      %v342 = vadd.f32 %v251, %v341
      %343 = vmatmul.bf16.gmra.mxu0 %v310
      %v344 = vpop.f32.mrf.mxu0
      %v345 = vadd.f32 %v251, %v344
      %v346 = vpop.f32.mrf.mxu0
      %v347 = vadd.f32 %v251, %v346
      %348 = vmatmul.bf16.gmra.mxu0 %v313
      %v349 = vpop.f32.mrf.mxu0
      %v350 = vadd.f32 %v251, %v349
      %v351 = vpop.f32.mrf.mxu0
      %v352 = vadd.f32 %v251, %v351
      %353 = vmatmul.bf16.gmra.mxu0 %v316
      %v354 = vpop.f32.mrf.mxu0
      %v355 = vadd.f32 %v251, %v354
      %v356 = vpop.f32.mrf.mxu0
      %v357 = vadd.f32 %v251, %v356
      %358 = vmatmul.bf16.gmra.mxu0 %v319
      %v359 = vpop.f32.mrf.mxu0
      %v360 = vadd.f32 %v251, %v359
      %v361 = vpop.f32.mrf.mxu0
      %v362 = vadd.f32 %v251, %v361
      %363 = vmatmul.bf16.gmra.mxu0 %v322
      %v364 = vpop.f32.mrf.mxu0
      %v365 = vadd.f32 %v251, %v364
      %v366 = vpop.f32.mrf.mxu0
      %v367 = vadd.f32 %v251, %v366
      %368 = vmatmul.bf16.gmra.mxu0 %v325
      %v369 = vpop.f32.mrf.mxu0
      %v370 = vadd.f32 %v251, %v369
      %v371 = vpop.f32.mrf.mxu0
      %v372 = vadd.f32 %v251, %v371
      %373 = vmatmul.bf16.gmra.mxu0 %v328
      %v374 = vpop.f32.mrf.mxu0
      %v375 = vadd.f32 %v251, %v374
      %v376 = vpop.f32.mrf.mxu0
      %v377 = vadd.f32 %v251, %v376
      %378 = vdwg.mxu0
      %v379 = vmax.f32 %v340, 0.0
      %v380 = vmax.f32 %v342, 0.0
      %v381 = vmax.f32 %v345, 0.0
      %v382 = vmax.f32 %v347, 0.0
      %v383 = vmax.f32 %v350, 0.0
      %v384 = vmax.f32 %v352, 0.0
      %v385 = vmax.f32 %v355, 0.0
      %v386 = vmax.f32 %v357, 0.0
      %v387 = vmax.f32 %v360, 0.0
      %v388 = vmax.f32 %v362, 0.0
      %v389 = vmax.f32 %v365, 0.0
      %v390 = vmax.f32 %v367, 0.0
      %v391 = vmax.f32 %v370, 0.0
      %v392 = vmax.f32 %v372, 0.0
      %v393 = vmax.f32 %v375, 0.0
      %v394 = vmax.f32 %v377, 0.0
      %v395 = vsel %vm305, %v379, 0.0
      %v396 = vrot.slane %v395, 4
      %v397 = vadd.f32 %v395, %v396
      %v398 = vrot.slane %v397, 2
      %v399 = vadd.f32 %v397, %v398
      %v400 = vrot.slane %v399, 1
      %v401 = vadd.f32 %v399, %v400
      %v402 = vsel %vm305, %v380, 0.0
      %v403 = vrot.slane %v402, 4
      %v404 = vadd.f32 %v402, %v403
      %v405 = vrot.slane %v404, 2
      %v406 = vadd.f32 %v404, %v405
      %v407 = vrot.slane %v406, 1
      %v408 = vadd.f32 %v406, %v407
      %v409 = vsel %vm305, %v381, 0.0
      %v410 = vrot.slane %v409, 4
      %v411 = vadd.f32 %v409, %v410
      %v412 = vrot.slane %v411, 2
      %v413 = vadd.f32 %v411, %v412
      %v414 = vrot.slane %v413, 1
      %v415 = vadd.f32 %v413, %v414
      %v416 = vsel %vm305, %v382, 0.0
      %v417 = vrot.slane %v416, 4
      %v418 = vadd.f32 %v416, %v417
      %v419 = vrot.slane %v418, 2
      %v420 = vadd.f32 %v418, %v419
      %v421 = vrot.slane %v420, 1
      %v422 = vadd.f32 %v420, %v421
      %v423 = vsel %vm305, %v383, 0.0
      %v424 = vrot.slane %v423, 4
      %v425 = vadd.f32 %v423, %v424
      %v426 = vrot.slane %v425, 2
      %v427 = vadd.f32 %v425, %v426
      %v428 = vrot.slane %v427, 1
      %v429 = vadd.f32 %v427, %v428
      %v430 = vsel %vm305, %v384, 0.0
      %v431 = vrot.slane %v430, 4
      %v432 = vadd.f32 %v430, %v431
      %v433 = vrot.slane %v432, 2
      %v434 = vadd.f32 %v432, %v433
      %v435 = vrot.slane %v434, 1
      %v436 = vadd.f32 %v434, %v435
      %v437 = vsel %vm305, %v385, 0.0
      %v438 = vrot.slane %v437, 4
      %v439 = vadd.f32 %v437, %v438
      %v440 = vrot.slane %v439, 2
      %v441 = vadd.f32 %v439, %v440
      %v442 = vrot.slane %v441, 1
      %v443 = vadd.f32 %v441, %v442
      %v444 = vsel %vm305, %v386, 0.0
      %v445 = vrot.slane %v444, 4
      %v446 = vadd.f32 %v444, %v445
      %v447 = vrot.slane %v446, 2
      %v448 = vadd.f32 %v446, %v447
      %v449 = vrot.slane %v448, 1
      %v450 = vadd.f32 %v448, %v449
      %v451 = vsel %vm305, %v387, 0.0
      %v452 = vrot.slane %v451, 4
      %v453 = vadd.f32 %v451, %v452
      %v454 = vrot.slane %v453, 2
      %v455 = vadd.f32 %v453, %v454
      %v456 = vrot.slane %v455, 1
      %v457 = vadd.f32 %v455, %v456
      %v458 = vsel %vm305, %v388, 0.0
      %v459 = vrot.slane %v458, 4
      %v460 = vadd.f32 %v458, %v459
      %v461 = vrot.slane %v460, 2
      %v462 = vadd.f32 %v460, %v461
      %v463 = vrot.slane %v462, 1
      %v464 = vadd.f32 %v462, %v463
      %v465 = vsel %vm305, %v389, 0.0
      %v466 = vrot.slane %v465, 4
      %v467 = vadd.f32 %v465, %v466
      %v468 = vrot.slane %v467, 2
      %v469 = vadd.f32 %v467, %v468
      %v470 = vrot.slane %v469, 1
      %v471 = vadd.f32 %v469, %v470
      %v472 = vsel %vm305, %v390, 0.0
      %v473 = vrot.slane %v472, 4
      %v474 = vadd.f32 %v472, %v473
      %v475 = vrot.slane %v474, 2
      %v476 = vadd.f32 %v474, %v475
      %v477 = vrot.slane %v476, 1
      %v478 = vadd.f32 %v476, %v477
      %v479 = vsel %vm305, %v391, 0.0
      %v480 = vrot.slane %v479, 4
      %v481 = vadd.f32 %v479, %v480
      %v482 = vrot.slane %v481, 2
      %v483 = vadd.f32 %v481, %v482
      %v484 = vrot.slane %v483, 1
      %v485 = vadd.f32 %v483, %v484
      %v486 = vsel %vm305, %v392, 0.0
      %v487 = vrot.slane %v486, 4
      %v488 = vadd.f32 %v486, %v487
      %v489 = vrot.slane %v488, 2
      %v490 = vadd.f32 %v488, %v489
      %v491 = vrot.slane %v490, 1
      %v492 = vadd.f32 %v490, %v491
      %v493 = vsel %vm305, %v393, 0.0
      %v494 = vrot.slane %v493, 4
      %v495 = vadd.f32 %v493, %v494
      %v496 = vrot.slane %v495, 2
      %v497 = vadd.f32 %v495, %v496
      %v498 = vrot.slane %v497, 1
      %v499 = vadd.f32 %v497, %v498
      %v500 = vsel %vm305, %v394, 0.0
      %v501 = vrot.slane %v500, 4
      %v502 = vadd.f32 %v500, %v501
      %v503 = vrot.slane %v502, 2
      %v504 = vadd.f32 %v502, %v503
      %v505 = vrot.slane %v504, 1
      %v506 = vadd.f32 %v504, %v505
      %v507 = vpack.c.bf16 %v401, %v401
      %v508 = vpack.c.bf16 %v408, %v408
      %v509 = vpack.c.bf16 %v415, %v415
      %v510 = vpack.c.bf16 %v422, %v422
      %v511 = vpack.c.bf16 %v429, %v429
      %v512 = vpack.c.bf16 %v436, %v436
      %v513 = vpack.c.bf16 %v443, %v443
      %v514 = vpack.c.bf16 %v450, %v450
      %v515 = vpack.c.bf16 %v457, %v457
      %v516 = vpack.c.bf16 %v464, %v464
      %v517 = vpack.c.bf16 %v471, %v471
      %v518 = vpack.c.bf16 %v478, %v478
      %v519 = vpack.c.bf16 %v485, %v485
      %v520 = vpack.c.bf16 %v492, %v492
      %v521 = vpack.c.bf16 %v499, %v499
      %v522 = vpack.c.bf16 %v506, %v506
      %v523 = vld [vmem:[%s3] sm:$0xf]
      %v524 = vld [vmem:[%s3 + $0x4] sm:$0xf]
      %v525 = vld [vmem:[%s3 + $0x8] sm:$0xf]
      %v526 = vld [vmem:[%s3 + $0xc] sm:$0xf]
      %v527 = vld [vmem:[%s4] sm:$0x1]
      %v529 = vperm.slane %v527, 0
      %v547 = vunpack.c.l.b16 %v507
      %v548 = vunpack.c.l.b16 %v508
      %v549 = vunpack.c.l.b16 %v509
      %v550 = vunpack.c.l.b16 %v510
      %v551 = vunpack.c.l.b16 %v511
      %v552 = vunpack.c.l.b16 %v512
      %v553 = vunpack.c.l.b16 %v513
      %v554 = vunpack.c.l.b16 %v514
      %v555 = vunpack.c.l.b16 %v515
      %v556 = vunpack.c.l.b16 %v516
      %v557 = vunpack.c.l.b16 %v517
      %v558 = vunpack.c.l.b16 %v518
      %v559 = vunpack.c.l.b16 %v519
      %v560 = vunpack.c.l.b16 %v520
      %v561 = vunpack.c.l.b16 %v521
      %v562 = vunpack.c.l.b16 %v522
      %vm563 = vcmask 1041409
      %v564 = vsel %vm563, %v548, %v547
      %vm565 = vcmask 1042434
      %v566 = vsel %vm565, %v549, %v564
      %vm567 = vcmask 1043459
      %v568 = vsel %vm567, %v550, %v566
      %vm569 = vcmask 1044484
      %v570 = vsel %vm569, %v551, %v568
      %vm571 = vcmask 1045509
      %v572 = vsel %vm571, %v552, %v570
      %vm573 = vcmask 1046534
      %v574 = vsel %vm573, %v553, %v572
      %vm575 = vcmask 1047559
      %v576 = vsel %vm575, %v554, %v574
      %v577 = vsel %vm563, %v556, %v555
      %v578 = vsel %vm565, %v557, %v577
      %v579 = vsel %vm567, %v558, %v578
      %v580 = vsel %vm569, %v559, %v579
      %v581 = vsel %vm571, %v560, %v580
      %v582 = vsel %vm573, %v561, %v581
      %v583 = vsel %vm575, %v562, %v582
      %v584 = vpack.c.b16 %v583, %v576
      %v589 = vunpack.c.l.b16 %v523
      %v590 = vunpack.c.l.b16 %v524
      %v591 = vunpack.c.l.b16 %v525
      %v592 = vunpack.c.l.b16 %v526
      %v593 = vpack.c.b16 %v590, %v589
      %v594 = vpack.c.b16 %v592, %v591
      %v598 = vsel %vm305, %v584, 0
      %600 = vmatpush.bf16.msra.mxu0 0
      %601 = vmatpush.bf16.msra.mxu0 0
      %602 = vmatpush.bf16.msra.mxu0 0
      %603 = vmatpush.bf16.msra.mxu0 0
      %604 = vmatpush.bf16.msra.mxu0 0
      %605 = vmatpush.bf16.msra.mxu0 0
      %606 = vmatpush.bf16.msra.mxu0 %v594
      %607 = vmatpush.bf16.msra.mxu0 %v593
      %608 = vmatmul.bf16.gmra.mxu0 %v598
      %v609 = vpop.f32.mrf.mxu0
      %v610 = vadd.f32 %v529, %v609
      %v611 = vpop.f32.mrf.mxu0
      %v612 = vadd.f32 %v529, %v611
      %613 = vdwg.mxu0
      %vm614 = vcmask 130048
      %615 = vst.msk [vmem:[%s226] sm:$0xff] %vm614, %v610
      %616 = vst.msk [vmem:[%s226 + $0x8] sm:$0xff] %vm614, %v612
      %s617 = smul.u32 2, %s16
      %p618 = scmp.lt.s32.totalorder %s617, 7
      %s619 = scalar_select %p618, %s617, 7
      %s620 = smul.addr %s619, 8
      %s621 = scalar_lea.vmem %s5, %s620
      // Predicated region
      $region41: #{tpu_custom_call.1} parent=39 // pred_check
        %p622 = pneg %p144
      $region42: #{tpu_custom_call.1} parent=39 // pred_check_branch
        %624 = sbr.rel (%p622) target = $region44
      $region43: #{tpu_custom_call.1} parent=39 // pred_region
        %s625 = smul.u32 2, %s16
      $region44: #{tpu_custom_call.1} parent=39 // pred_fallthru
        _
    $region40: #{tpu_custom_call.1} parent=5 // pred_fallthru
      _
    %p626 = scmp.le.s32.totalorder 2, %s11
    // Predicated region
    $region45: #{tpu_custom_call.1} parent=5 // pred_check
      %p627 = pneg %p626
    $region46: #{tpu_custom_call.1} parent=5 // pred_check_branch
      %629 = sbr.rel (%p627) target = $region48
    $region47: #{tpu_custom_call.1} parent=5 // pred_region
      %s630 = ssub.s32 %s11, 2
      // Predicated region
      $region49: #{tpu_custom_call.1} parent=47 // pred_check
        %p631 = pneg %p150
      $region50: #{tpu_custom_call.1} parent=47 // pred_check_branch
        %633 = sbr.rel (%p631) target = $region52
      $region51: #{tpu_custom_call.1} parent=47 // pred_region
        %s634 = smul.u32 2, %s17
        %p635 = scmp.lt.s32.totalorder %s634, 7
        %s636 = scalar_select %p635, %s634, 7
        %s637 = smul.addr %s636, 8
        %s638 = scalar_lea.vmem %s5, %s637
      $region52: #{tpu_custom_call.1} parent=47 // pred_fallthru
        _
    $region48: #{tpu_custom_call.1} parent=5 // pred_fallthru
      _
  $region6: #{tpu_custom_call.1} parent=0 // loop_footer
    %s15 = sadd.s32 1, %s11
  $region7: #{tpu_custom_call.1} parent=0 // loop_footer_branch
    %10 = sbr.rel target = $region3
  $region8: #{tpu_custom_call.1} parent=0 // loop_exit
    _

</llo_original>
